<compile_context>
chip_gen: v7x
topology: tpu7x:2x2x1
jax: 0.10.0
libtpu: 0.0.40
codegen_flags: <defaults>
</compile_context>

<pallas_src>
import functools
import math

import jax
import jax.numpy as jnp
from jax import lax
from jax.experimental import pallas as pl
from jax.experimental.pallas import tpu as pltpu


def _fused_attn_kernel(x_ref, wqkv_ref, bqkv_ref, mask_ref, o_ref, *,
                       heads, seq, d_out):
    # x_ref    : (1, H*S, Din)        f32
    # wqkv_ref : (Din, 3*Dout)        bf16  (q | k | v fused along lanes)
    # bqkv_ref : (1, 3*Dout)          f32
    # mask_ref : (1, H, S, S)         f32   (0.0 or 2.0 == inverted-dropout scale)
    # o_ref    : (1, S, H*Dout)       f32   (lane-dense: H*Dout == 128)
    x2d = x_ref[0].astype(jnp.bfloat16)                         # (H*S, Din)

    # Single fused QKV projection on the MXU, f32 accumulation.
    qkv = jnp.dot(x2d, wqkv_ref[...],
                  preferred_element_type=jnp.float32) + bqkv_ref[...]   # (H*S, 3*Dout)

    scale = 1.0 / math.sqrt(float(d_out))
    outs = []
    for h in range(heads):                                      # static unroll, H=2
        r0 = h * seq
        q_h = qkv[r0:r0 + seq, 0 * d_out:1 * d_out]             # (S, Dout)
        k_h = qkv[r0:r0 + seq, 1 * d_out:2 * d_out]
        v_h = qkv[r0:r0 + seq, 2 * d_out:3 * d_out]

        # q @ k^T without materializing a transpose (contract dim 1 vs dim 1).
        scores = lax.dot_general(
            q_h.astype(jnp.bfloat16), k_h.astype(jnp.bfloat16),
            dimension_numbers=(((1,), (1,)), ((), ())),
            preferred_element_type=jnp.float32) * scale          # (S, S) f32

        # Softmax over the last axis (kept in f32).
        m = jnp.max(scores, axis=-1, keepdims=True)
        e = jnp.exp(scores - m)
        # NOTE: approx=True (EUP vrcp) is preferable on hardware, but it has no
        # HLO/interpret lowering, so we keep the exact reciprocal for portability.
        p = e * pl.reciprocal(jnp.sum(e, axis=-1, keepdims=True), approx=False)

        # Inverted dropout, p=0.5: multiply by precomputed {0.0, 2.0} scale mask.
        dropped = p * mask_ref[0, h]                             # (S, S)

        out_h = jnp.dot(dropped.astype(jnp.bfloat16), v_h.astype(jnp.bfloat16),
                        preferred_element_type=jnp.float32)      # (S, Dout)
        outs.append(out_h)

    # Lane-dense store: (S, H*Dout) = (8, 128).
    o_ref[0] = jnp.concatenate(outs, axis=-1).astype(o_ref.dtype)


def attention_forward(x, wq, bq, wk, bk, wv, bv, dropout_key):
    """x: (B, H, S, Din); w*: (Din, Dout); b*: (1, Dout). Returns (B, H, S, Dout)."""
    B, H, S, Din = x.shape
    Dout = wq.shape[1]

    # Fuse the three projections into one lane-dense weight / bias.
    wqkv = jnp.concatenate([wq, wk, wv], axis=1).astype(jnp.bfloat16)   # (Din, 3*Dout)
    bqkv = jnp.concatenate([bq, bk, bv], axis=1).astype(jnp.float32)    # (1, 3*Dout)

    # TODO(synk): dropout RNG is generated host-side (jax.random.bernoulli) because
    # pltpu.prng_seed / prng_random_bits have no interpret/HLO lowering; stream will
    # not match PyTorch's dropout RNG (same Bernoulli(0.5) distribution).
    mask = jax.random.bernoulli(dropout_key, 0.5, (B, H, S, S)).astype(jnp.float32) * 2.0

    # Fold heads into rows so the QKV projection sees H*S rows per batch.
    x_rows = x.reshape(B, H * S, Din)

    kernel = functools.partial(_fused_attn_kernel, heads=H, seq=S, d_out=Dout)

    out_ld = pl.pallas_call(
        kernel,
        out_shape=jax.ShapeDtypeStruct((B, S, H * Dout), jnp.float32),
        grid=(B,),
        in_specs=[
            pl.BlockSpec((1, H * S, Din), lambda b: (b, 0, 0)),
            pl.BlockSpec((Din, 3 * Dout), lambda b: (0, 0)),
            pl.BlockSpec((1, 3 * Dout),   lambda b: (0, 0)),
            pl.BlockSpec((1, H, S, S),    lambda b: (b, 0, 0, 0)),
        ],
        out_specs=pl.BlockSpec((1, S, H * Dout), lambda b: (b, 0, 0)),
        compiler_params=pltpu.CompilerParams(
            dimension_semantics=("parallel",)),
    )(x_rows, wqkv, bqkv, mask)

    # (B, S, H*Dout) -> (B, H, S, Dout): pure layout plumbing outside the kernel.
    return out_ld.reshape(B, S, H, Dout).transpose(0, 2, 1, 3)


if __name__ == "__main__":
    # Small shapes consistent with the module's forward:
    #   x: (B, H, S, Din); Linear(Din -> Dout) acts on the last axis.
    B, H, S, Din, Dout = 2, 2, 8, 32, 64

    key = jax.random.PRNGKey(0)
    kx, kq, kbq, kk, kbk, kv, kbv, kdrop = jax.random.split(key, 8)

    # PyTorch Linear-style uniform init, bound 1/sqrt(Din).
    bound = 1.0 / math.sqrt(Din)
    x = jax.random.normal(kx, (B, H, S, Din), dtype=jnp.float32)
    wq = jax.random.uniform(kq,  (Din, Dout), jnp.float32, -bound, bound)
    bq = jax.random.uniform(kbq, (1, Dout),   jnp.float32, -bound, bound)
    wk = jax.random.uniform(kk,  (Din, Dout), jnp.float32, -bound, bound)
    bk = jax.random.uniform(kbk, (1, Dout),   jnp.float32, -bound, bound)
    wv = jax.random.uniform(kv,  (Din, Dout), jnp.float32, -bound, bound)
    bv = jax.random.uniform(kbv, (1, Dout),   jnp.float32, -bound, bound)

    out = attention_forward(x, wq, bq, wk, bk, wv, bv, kdrop)
    jax.block_until_ready(out)
    assert out.shape == (B, H, S, Dout)
    print("KERNEL_OK")
</pallas_src>

<mosaic_0001>
module attributes {stable_mosaic.version = 11 : i64} {
  func.func @_fused_attn_kernel(%arg0: i32, %arg1: memref<1x16x32xf32, #tpu.memory_space<vmem>>, %arg2: memref<32x192xbf16, #tpu.memory_space<vmem>>, %arg3: memref<1x192xf32, #tpu.memory_space<vmem>>, %arg4: memref<1x2x8x8xf32, #tpu.memory_space<vmem>>, %arg5: memref<1x8x128xf32, #tpu.memory_space<vmem>>) attributes {dimension_semantics = [#tpu.dimension_semantics<parallel>], iteration_bounds = array<i64: 2>, scalar_prefetch = 0 : i64, scratch_operands = 0 : i64, tpu.core_type = #tpu.core_type<tc>, window_params = [{transform_indices = @transform_0, window_bounds = array<i64: 1, 16, 32>}, {pipeline_mode = #tpu.pipeline_mode<synchronous>, transform_indices = @transform_1, window_bounds = array<i64: 32, 192>}, {pipeline_mode = #tpu.pipeline_mode<synchronous>, transform_indices = @transform_2, window_bounds = array<i64: 1, 192>}, {transform_indices = @transform_3, window_bounds = array<i64: 1, 2, 8, 8>}, {transform_indices = @transform_4, window_bounds = array<i64: 1, 8, 128>}]} {
    %c0 = arith.constant 0 : index
    %c0_0 = arith.constant 0 : index
    %c0_1 = arith.constant 0 : index
    %0 = vector.load %arg1[%c0, %c0_0, %c0_1] : memref<1x16x32xf32, #tpu.memory_space<vmem>>, vector<1x16x32xf32>
    %1 = vector.shape_cast %0 : vector<1x16x32xf32> to vector<16x32xf32>
    %2 = arith.truncf %1 : vector<16x32xf32> to vector<16x32xbf16>
    %c0_2 = arith.constant 0 : index
    %c0_3 = arith.constant 0 : index
    %3 = vector.load %arg2[%c0_2, %c0_3] : memref<32x192xbf16, #tpu.memory_space<vmem>>, vector<32x192xbf16>
    %cst = arith.constant dense<0.000000e+00> : vector<16x192xf32>
    %4 = tpu.matmul %2, %3, %cst {dimension_numbers = #tpu.dot_dimension_numbers<[1], [0], [0], [1], [0, 0, 1, 1], [], []>} : vector<16x32xbf16>, vector<32x192xbf16>, vector<16x192xf32> -> vector<16x192xf32>
    %c0_4 = arith.constant 0 : index
    %c0_5 = arith.constant 0 : index
    %5 = vector.load %arg3[%c0_4, %c0_5] : memref<1x192xf32, #tpu.memory_space<vmem>>, vector<1x192xf32>
    %6 = vector.broadcast %5 : vector<1x192xf32> to vector<16x192xf32>
    %7 = arith.addf %4, %6 : vector<16x192xf32>
    %8 = vector.extract_strided_slice %7 {offsets = [0, 0], sizes = [8, 64], strides = [1, 1]} : vector<16x192xf32> to vector<8x64xf32>
    %9 = vector.extract_strided_slice %7 {offsets = [0, 64], sizes = [8, 64], strides = [1, 1]} : vector<16x192xf32> to vector<8x64xf32>
    %10 = vector.extract_strided_slice %7 {offsets = [0, 128], sizes = [8, 64], strides = [1, 1]} : vector<16x192xf32> to vector<8x64xf32>
    %11 = arith.truncf %8 : vector<8x64xf32> to vector<8x64xbf16>
    %12 = arith.truncf %9 : vector<8x64xf32> to vector<8x64xbf16>
    %cst_6 = arith.constant dense<0.000000e+00> : vector<8x8xf32>
    %13 = tpu.matmul %11, %12, %cst_6 {dimension_numbers = #tpu.dot_dimension_numbers<[1], [1], [0], [0], [0, 0, 1, 0], [], []>} : vector<8x64xbf16>, vector<8x64xbf16>, vector<8x8xf32> -> vector<8x8xf32>
    %cst_7 = arith.constant 1.250000e-01 : f32
    %14 = vector.broadcast %cst_7 : f32 to vector<8x8xf32>
    %15 = arith.mulf %13, %14 : vector<8x8xf32>
    %cst_8 = arith.constant dense<0xFF800000> : vector<8xf32>
    %16 = vector.multi_reduction <maximumf>, %15, %cst_8 [1] : vector<8x8xf32> to vector<8xf32>
    %17 = vector.shape_cast %16 : vector<8xf32> to vector<8x1xf32>
    %18 = vector.broadcast %17 : vector<8x1xf32> to vector<8x8xf32>
    %19 = arith.subf %15, %18 : vector<8x8xf32>
    %20 = math.exp %19 : vector<8x8xf32>
    %cst_9 = arith.constant dense<0.000000e+00> : vector<8xf32>
    %21 = vector.multi_reduction <add>, %20, %cst_9 [1] : vector<8x8xf32> to vector<8xf32>
    %22 = vector.shape_cast %21 : vector<8xf32> to vector<8x1xf32>
    %23 = tpu.reciprocal %22 : vector<8x1xf32> -> vector<8x1xf32>
    %24 = vector.broadcast %23 : vector<8x1xf32> to vector<8x8xf32>
    %25 = arith.mulf %20, %24 : vector<8x8xf32>
    %c0_10 = arith.constant 0 : index
    %c0_11 = arith.constant 0 : index
    %c0_12 = arith.constant 0 : index
    %c0_13 = arith.constant 0 : index
    %26 = vector.load %arg4[%c0_10, %c0_11, %c0_12, %c0_13] : memref<1x2x8x8xf32, #tpu.memory_space<vmem>>, vector<1x1x8x8xf32>
    %27 = vector.shape_cast %26 : vector<1x1x8x8xf32> to vector<8x8xf32>
    %28 = arith.mulf %25, %27 : vector<8x8xf32>
    %29 = arith.truncf %28 : vector<8x8xf32> to vector<8x8xbf16>
    %30 = arith.truncf %10 : vector<8x64xf32> to vector<8x64xbf16>
    %cst_14 = arith.constant dense<0.000000e+00> : vector<8x64xf32>
    %31 = tpu.matmul %29, %30, %cst_14 {dimension_numbers = #tpu.dot_dimension_numbers<[1], [0], [0], [1], [0, 0, 1, 1], [], []>} : vector<8x8xbf16>, vector<8x64xbf16>, vector<8x64xf32> -> vector<8x64xf32>
    %32 = vector.extract_strided_slice %7 {offsets = [8, 0], sizes = [8, 64], strides = [1, 1]} : vector<16x192xf32> to vector<8x64xf32>
    %33 = vector.extract_strided_slice %7 {offsets = [8, 64], sizes = [8, 64], strides = [1, 1]} : vector<16x192xf32> to vector<8x64xf32>
    %34 = vector.extract_strided_slice %7 {offsets = [8, 128], sizes = [8, 64], strides = [1, 1]} : vector<16x192xf32> to vector<8x64xf32>
    %35 = arith.truncf %32 : vector<8x64xf32> to vector<8x64xbf16>
    %36 = arith.truncf %33 : vector<8x64xf32> to vector<8x64xbf16>
    %cst_15 = arith.constant dense<0.000000e+00> : vector<8x8xf32>
    %37 = tpu.matmul %35, %36, %cst_15 {dimension_numbers = #tpu.dot_dimension_numbers<[1], [1], [0], [0], [0, 0, 1, 0], [], []>} : vector<8x64xbf16>, vector<8x64xbf16>, vector<8x8xf32> -> vector<8x8xf32>
    %cst_16 = arith.constant 1.250000e-01 : f32
    %38 = vector.broadcast %cst_16 : f32 to vector<8x8xf32>
    %39 = arith.mulf %37, %38 : vector<8x8xf32>
    %cst_17 = arith.constant dense<0xFF800000> : vector<8xf32>
    %40 = vector.multi_reduction <maximumf>, %39, %cst_17 [1] : vector<8x8xf32> to vector<8xf32>
    %41 = vector.shape_cast %40 : vector<8xf32> to vector<8x1xf32>
    %42 = vector.broadcast %41 : vector<8x1xf32> to vector<8x8xf32>
    %43 = arith.subf %39, %42 : vector<8x8xf32>
    %44 = math.exp %43 : vector<8x8xf32>
    %cst_18 = arith.constant dense<0.000000e+00> : vector<8xf32>
    %45 = vector.multi_reduction <add>, %44, %cst_18 [1] : vector<8x8xf32> to vector<8xf32>
    %46 = vector.shape_cast %45 : vector<8xf32> to vector<8x1xf32>
    %47 = tpu.reciprocal %46 : vector<8x1xf32> -> vector<8x1xf32>
    %48 = vector.broadcast %47 : vector<8x1xf32> to vector<8x8xf32>
    %49 = arith.mulf %44, %48 : vector<8x8xf32>
    %c0_19 = arith.constant 0 : index
    %c1 = arith.constant 1 : index
    %c0_20 = arith.constant 0 : index
    %c0_21 = arith.constant 0 : index
    %50 = vector.load %arg4[%c0_19, %c1, %c0_20, %c0_21] : memref<1x2x8x8xf32, #tpu.memory_space<vmem>>, vector<1x1x8x8xf32>
    %51 = vector.shape_cast %50 : vector<1x1x8x8xf32> to vector<8x8xf32>
    %52 = arith.mulf %49, %51 : vector<8x8xf32>
    %53 = arith.truncf %52 : vector<8x8xf32> to vector<8x8xbf16>
    %54 = arith.truncf %34 : vector<8x64xf32> to vector<8x64xbf16>
    %cst_22 = arith.constant dense<0.000000e+00> : vector<8x64xf32>
    %55 = tpu.matmul %53, %54, %cst_22 {dimension_numbers = #tpu.dot_dimension_numbers<[1], [0], [0], [1], [0, 0, 1, 1], [], []>} : vector<8x8xbf16>, vector<8x64xbf16>, vector<8x64xf32> -> vector<8x64xf32>
    %56 = tpu.concatenate %31, %55 in 1 : vector<8x64xf32>, vector<8x64xf32> -> vector<8x128xf32>
    %c0_23 = arith.constant 0 : index
    %c0_24 = arith.constant 0 : index
    %c0_25 = arith.constant 0 : index
    %57 = vector.load %arg5[%c0_23, %c0_24, %c0_25] : memref<1x8x128xf32, #tpu.memory_space<vmem>>, vector<1x8x128xf32>
    %58 = vector.shape_cast %57 : vector<1x8x128xf32> to vector<8x128xf32>
    %59 = vector.shape_cast %56 : vector<8x128xf32> to vector<1x8x128xf32>
    tpu.vector_store %arg5[%c0_23, %c0_24, %c0_25], %59 {strides = array<i32>} : memref<1x8x128xf32, #tpu.memory_space<vmem>>, vector<1x8x128xf32>,
    return
  }
  func.func @transform_0(%arg0: i32) -> (i32, i32, i32) {
    %c0_i32 = arith.constant 0 : i32
    %c0_i32_0 = arith.constant 0 : i32
    %c0_i32_1 = arith.constant 0 : i32
    return %arg0, %c0_i32, %c0_i32_0 : i32, i32, i32
  }
  func.func @transform_1(%arg0: i32) -> (i32, i32) {
    %c0_i32 = arith.constant 0 : i32
    %c0_i32_0 = arith.constant 0 : i32
    %c0_i32_1 = arith.constant 0 : i32
    return %c0_i32, %c0_i32_0 : i32, i32
  }
  func.func @transform_2(%arg0: i32) -> (i32, i32) {
    %c0_i32 = arith.constant 0 : i32
    %c0_i32_0 = arith.constant 0 : i32
    %c0_i32_1 = arith.constant 0 : i32
    return %c0_i32, %c0_i32_0 : i32, i32
  }
  func.func @transform_3(%arg0: i32) -> (i32, i32, i32, i32) {
    %c0_i32 = arith.constant 0 : i32
    %c0_i32_0 = arith.constant 0 : i32
    %c0_i32_1 = arith.constant 0 : i32
    %c0_i32_2 = arith.constant 0 : i32
    return %arg0, %c0_i32, %c0_i32_0, %c0_i32_1 : i32, i32, i32, i32
  }
  func.func @transform_4(%arg0: i32) -> (i32, i32, i32) {
    %c0_i32 = arith.constant 0 : i32
    %c0_i32_0 = arith.constant 0 : i32
    %c0_i32_1 = arith.constant 0 : i32
    return %arg0, %c0_i32, %c0_i32_0 : i32, i32, i32
  }
}

</mosaic_0001>

<llo_original>
// kernel: tpu_custom_call.1
$region0: #{tpu_custom_call.1}
  #allocation0 [shape = 'u32[]', space=smem, size = 0x4, offset = 0x4, fixed_abs, tag = 'smem constant byte address 0x4 - core index']
  #allocation1 [shape = 'u32[144,128]{1,0:T(1,128)}', space=vmem, size = 0x12000, scoped, tag = 'internal scratch']
  %s0 = inlined_call_operand.hbm [shape: f32[2,16,32], index: 0, kind: input, shape index: {}]
  %s1 = inlined_call_operand.hbm [shape: bf16[32,192], index: 1, kind: input, shape index: {}]
  %s2 = inlined_call_operand.vmem [shape: f32[1,192], index: 2, kind: input, shape index: {}]
  %s3 = inlined_call_operand.hbm [shape: f32[2,2,8,8], index: 3, kind: input, shape index: {}]
  %s4 = inlined_call_operand.hbm [shape: f32[2,8,128], index: 4, kind: output, shape index: {}]
  %s5 = sld [smem:[#allocation0]]
  $region61: #{tpu_custom_call.1} parent=0
    _
  %s7 = ssub.s32 1, %s5
  %s8 = scalar_select 0, %s7, %s5
  $region1: #{tpu_custom_call.1} parent=0
    #allocation2 [shape = 'u8[16384]{0}', space=vmem, size = 0x4000, scoped, tag = 'input window, operand 0']
    #allocation3 [shape = 's32[2]{0}', space=sflag, size = 0x8, scoped, tag = 'scoped memory for tpu_custom_call.1']
    #allocation4 [shape = 's32[2]{0}', space=sflag, size = 0x8, scoped, tag = 'scoped memory for tpu_custom_call.1']
    #allocation5 [shape = 'u8[16384]{0}', space=vmem, size = 0x4000, scoped, tag = 'input window, operand 1, single buffered']
    #allocation6 [shape = 's32[1]{0}', space=sflag, size = 0x4, scoped, tag = 'scoped memory for tpu_custom_call.1']
    #allocation7 [shape = 'u8[16384]{0}', space=vmem, size = 0x4000, scoped, tag = 'input window, operand 3']
    #allocation8 [shape = 'u8[8192]{0}', space=vmem, size = 0x2000, scoped, tag = 'output window, operand 0']
    %9 = vsyncpa [#allocation3], 0
    %s10 = scalar_lea.sflag [#allocation3], 1
    %11 = vsyncpa %s10, 0
    %12 = vsyncpa [#allocation6], 0
    %13 = vsyncpa [#allocation4], 0
    %s14 = scalar_lea.sflag [#allocation4], 1
    %15 = vsyncpa %s14, 0
    loop: start=0, step=1, limit=4
    $region2: #{tpu_custom_call.1} parent=1 // loop_pre_header
      _
    $region3: #{tpu_custom_call.1} parent=1 // loop_header
      %s17 = sphi 0, %s21
      %p18 = scmp.ge.s32.totalorder %s17, 4
      %s27 = sphi 0, %s29
      %s30 = sphi 0, %s27
      %s31 = sphi 0, %s30
      %s47 = sphi 0, %s31
      %s51 = sphi 0, %s51
      %s53 = sphi 0, %s51
      %s54 = sphi 0, %s53
      %s68 = sphi 0, %s54
      %s72 = sphi 0, %s72
      %s74 = sphi 0, %s72
      %s75 = sphi 0, %s74
      %s89 = sphi 0, %s75
      %s95 = sphi 0, %s97
      %s98 = sphi 0, %s95
      %s99 = sphi 0, %s98
      %s115 = sphi 0, %s99
      %s121 = sphi 0, %s123
      %s124 = sphi 0, %s121
      %s125 = sphi 0, %s124
      %s141 = sphi 0, %s125
    $region4: #{tpu_custom_call.1} parent=1 // loop_header_branch
      %20 = sbr.rel (%p18) target = $region8
    $region5: #{tpu_custom_call.1} parent=1 // loop_body
      %s22 = ssub.s32 %s17, 1
      %s23 = ssub.s32 %s17, 2
      %s24 = sadd.s32 %s17, 1
      %s25 = ssub.s32 %s17, %s24
      %p26 = scmp.eq.s32.totalorder %s25, 0
      %s28 = sadd.s32 %s27, 1
      %s29 = scalar_select %p26, %s27, %s28
      %p32 = pneg %p26
      %p33 = scmp.eq.s32.totalorder %s17, 1
      %p34 = por %p32, %p33
      %p35 = scmp.ne.s32.totalorder %s27, %s30
      %p36 = scmp.eq.s32.totalorder %s17, 0
      %p37 = por %p35, %p36
      %p38 = scmp.ne.s32.totalorder %s27, %s30
      %p39 = scmp.eq.s32.totalorder %s22, 1
      %p40 = por %p38, %p39
      %p41 = scmp.ne.s32.totalorder %s30, %s31
      %p42 = scmp.eq.s32.totalorder %s22, 0
      %p43 = por %p41, %p42
      %p44 = scmp.ne.s32.totalorder %s30, %s31
      %p45 = scmp.eq.s32.totalorder %s23, 1
      %p46 = por %p44, %p45
      %p48 = scmp.ne.s32.totalorder %s31, %s47
      %p49 = scmp.eq.s32.totalorder %s23, 0
      %p50 = por %p48, %p49
      %s52 = sadd.s32 %s51, 1
      %p55 = scmp.eq.s32.totalorder %s17, 1
      %p56 = scmp.ne.s32.totalorder %s51, %s53
      %p57 = scmp.eq.s32.totalorder %s17, 0
      %p58 = por %p56, %p57
      %p59 = scmp.ne.s32.totalorder %s51, %s53
      %p60 = scmp.eq.s32.totalorder %s22, 1
      %p61 = por %p59, %p60
      %p62 = scmp.ne.s32.totalorder %s53, %s54
      %p63 = scmp.eq.s32.totalorder %s22, 0
      %p64 = por %p62, %p63
      %p65 = scmp.ne.s32.totalorder %s53, %s54
      %p66 = scmp.eq.s32.totalorder %s23, 1
      %p67 = por %p65, %p66
      %p69 = scmp.ne.s32.totalorder %s54, %s68
      %p70 = scmp.eq.s32.totalorder %s23, 0
      %p71 = por %p69, %p70
      %s73 = sadd.s32 %s72, 1
      %p76 = scmp.eq.s32.totalorder %s17, 1
      %p77 = scmp.ne.s32.totalorder %s72, %s74
      %p78 = scmp.eq.s32.totalorder %s17, 0
      %p79 = por %p77, %p78
      %p80 = scmp.ne.s32.totalorder %s72, %s74
      %p81 = scmp.eq.s32.totalorder %s22, 1
      %p82 = por %p80, %p81
      %p83 = scmp.ne.s32.totalorder %s74, %s75
      %p84 = scmp.eq.s32.totalorder %s22, 0
      %p85 = por %p83, %p84
      %p86 = scmp.ne.s32.totalorder %s74, %s75
      %p87 = scmp.eq.s32.totalorder %s23, 1
      %p88 = por %p86, %p87
      %p90 = scmp.ne.s32.totalorder %s75, %s89
      %p91 = scmp.eq.s32.totalorder %s23, 0
      %p92 = por %p90, %p91
      %s93 = ssub.s32 %s17, %s24
      %p94 = scmp.eq.s32.totalorder %s93, 0
      %s96 = sadd.s32 %s95, 1
      %s97 = scalar_select %p94, %s95, %s96
      %p100 = pneg %p94
      %p101 = scmp.eq.s32.totalorder %s17, 1
      %p102 = por %p100, %p101
      %p103 = scmp.ne.s32.totalorder %s95, %s98
      %p104 = scmp.eq.s32.totalorder %s17, 0
      %p105 = por %p103, %p104
      %p106 = scmp.ne.s32.totalorder %s95, %s98
      %p107 = scmp.eq.s32.totalorder %s22, 1
      %p108 = por %p106, %p107
      %p109 = scmp.ne.s32.totalorder %s98, %s99
      %p110 = scmp.eq.s32.totalorder %s22, 0
      %p111 = por %p109, %p110
      %p112 = scmp.ne.s32.totalorder %s98, %s99
      %p113 = scmp.eq.s32.totalorder %s23, 1
      %p114 = por %p112, %p113
      %p116 = scmp.ne.s32.totalorder %s99, %s115
      %p117 = scmp.eq.s32.totalorder %s23, 0
      %p118 = por %p116, %p117
      %s119 = ssub.s32 %s17, %s24
      %p120 = scmp.eq.s32.totalorder %s119, 0
      %s122 = sadd.s32 %s121, 1
      %s123 = scalar_select %p120, %s121, %s122
      %p126 = pneg %p120
      %p127 = scmp.eq.s32.totalorder %s17, 1
      %p128 = por %p126, %p127
      %p129 = scmp.ne.s32.totalorder %s121, %s124
      %p130 = scmp.eq.s32.totalorder %s17, 0
      %p131 = por %p129, %p130
      %p132 = scmp.ne.s32.totalorder %s121, %s124
      %p133 = scmp.eq.s32.totalorder %s22, 1
      %p134 = por %p132, %p133
      %p135 = scmp.ne.s32.totalorder %s124, %s125
      %p136 = scmp.eq.s32.totalorder %s22, 0
      %p137 = por %p135, %p136
      %p138 = scmp.ne.s32.totalorder %s124, %s125
      %p139 = scmp.eq.s32.totalorder %s23, 1
      %p140 = por %p138, %p139
      %p142 = scmp.ne.s32.totalorder %s125, %s141
      %p143 = scmp.eq.s32.totalorder %s23, 0
      %p144 = por %p142, %p143
      %p145 = scmp.le.s32.totalorder 1, %s17
      %p146 = scmp.lt.s32.totalorder %s17, 3
      %p147 = pnand %p145, %p146
      %p148 = pneg %p147
      // Predicated region
      $region9: #{tpu_custom_call.1} parent=5 // pred_check
        _
      $region10: #{tpu_custom_call.1} parent=5 // pred_check_branch
        %150 = sbr.rel (%p147) target = $region12
      $region11: #{tpu_custom_call.1} parent=5 // pred_region
        %s151 = ssub.s32 %s17, 1
        // Predicated region
        $region13: #{tpu_custom_call.1} parent=11 // pred_check
          %p152 = pneg %p64
        $region14: #{tpu_custom_call.1} parent=11 // pred_check_branch
          %154 = sbr.rel (%p152) target = $region16
        $region15: #{tpu_custom_call.1} parent=11 // pred_region
          %s156 = ssub.s32 512, 512
          %157 = vsyncadd [#allocation6], %s156
          %s158 = sshll.u32 [#allocation5], 4
          %s159 = int_to_ptr.vmem [resolvable:$true] %s158
          %164 = dma.hbm_to_vmem [thread:$0]  %s1, 512, %s159, [#allocation6], 128, 128, 8
        $region16: #{tpu_custom_call.1} parent=11 // pred_fallthru
          _
        // Predicated region
        $region17: #{tpu_custom_call.1} parent=11 // pred_check
          %p165 = pneg %p85
        $region18: #{tpu_custom_call.1} parent=11 // pred_check_branch
          %167 = sbr.rel (%p165) target = $region20
        $region19: #{tpu_custom_call.1} parent=11 // pred_region
          _
        $region20: #{tpu_custom_call.1} parent=11 // pred_fallthru
          _
      $region12: #{tpu_custom_call.1} parent=5 // pred_fallthru
        _
      %p168 = scmp.lt.s32.totalorder %s17, 2
      // Predicated region
      $region21: #{tpu_custom_call.1} parent=5 // pred_check
        %p169 = pneg %p168
      $region22: #{tpu_custom_call.1} parent=5 // pred_check_branch
        %171 = sbr.rel (%p169) target = $region24
      $region23: #{tpu_custom_call.1} parent=5 // pred_region
        // Predicated region
        $region25: #{tpu_custom_call.1} parent=23 // pred_check
          %p172 = pneg %p37
        $region26: #{tpu_custom_call.1} parent=23 // pred_check_branch
          %174 = sbr.rel (%p172) target = $region28
        $region27: #{tpu_custom_call.1} parent=23 // pred_region
          %s175 = sand.u32 %s17, 1
          %s176 = scalar_lea.sflag [#allocation3], %s175
          %s177 = sand.u32 %s27, 1
          %s178 = smul.addr %s177, 16
          %s179 = scalar_lea.vmem [#allocation2], %s178
          %s181 = ssub.s32 256, 256
          %182 = vsyncadd %s176, %s181
          %s183 = smul.addr %s17, 2
          %s184 = smul.addr %s183, 128
          %s185 = scalar_lea.hbm %s0, %s184
          %s186 = sshll.u32 %s179, 4
          %s187 = int_to_ptr.vmem [resolvable:$true] %s186
          %192 = dma.hbm_to_vmem [thread:$0]  %s185, 256, %s187, %s176, 128, 128, 8
        $region28: #{tpu_custom_call.1} parent=23 // pred_fallthru
          _
        // Predicated region
        $region29: #{tpu_custom_call.1} parent=23 // pred_check
          %p193 = pneg %p105
        $region30: #{tpu_custom_call.1} parent=23 // pred_check_branch
          %195 = sbr.rel (%p193) target = $region32
        $region31: #{tpu_custom_call.1} parent=23 // pred_region
          %s196 = sand.u32 %s17, 1
          %s197 = scalar_lea.sflag [#allocation3], %s196
          %s198 = sand.u32 %s95, 1
          %s199 = smul.addr %s198, 16
          %s200 = scalar_lea.vmem [#allocation7], %s199
          %s202 = ssub.s32 256, 256
          %203 = vsyncadd %s197, %s202
          %s204 = smul.addr %s17, 2
          %s205 = smul.addr %s204, 128
          %s206 = scalar_lea.hbm %s3, %s205
          %s207 = sshll.u32 %s200, 4
          %s208 = int_to_ptr.vmem [resolvable:$true] %s207
          %213 = dma.hbm_to_vmem [thread:$0]  %s206, 256, %s208, %s197, 128, 128, 8
        $region32: #{tpu_custom_call.1} parent=23 // pred_fallthru
          _
      $region24: #{tpu_custom_call.1} parent=5 // pred_fallthru
        _
      %p214 = scmp.le.s32.totalorder 1, %s17
      %p215 = scmp.lt.s32.totalorder %s17, 3
      %p216 = pnand %p214, %p215
      %p217 = pneg %p216
      // Predicated region
      $region33: #{tpu_custom_call.1} parent=5 // pred_check
        _
      $region34: #{tpu_custom_call.1} parent=5 // pred_check_branch
        %219 = sbr.rel (%p216) target = $region36
      $region35: #{tpu_custom_call.1} parent=5 // pred_region
        %s220 = ssub.s32 %s17, 1
        %s221 = sand.u32 %s22, 1
        %s222 = scalar_lea.sflag [#allocation3], %s221
        %s223 = sand.u32 %s30, 1
        %s224 = smul.addr %s223, 16
        %s225 = scalar_lea.vmem [#allocation2], %s224
        // Predicated region
        $region37: #{tpu_custom_call.1} parent=35 // pred_check
          %p226 = pneg %p43
        $region38: #{tpu_custom_call.1} parent=35 // pred_check_branch
          %228 = sbr.rel (%p226) target = $region40
        $region39: #{tpu_custom_call.1} parent=35 // pred_region
          %229 = dma.done %s222, 256
        $region40: #{tpu_custom_call.1} parent=35 // pred_fallthru
          _
        // Predicated region
        $region41: #{tpu_custom_call.1} parent=35 // pred_check
          %p230 = pneg %p64
        $region42: #{tpu_custom_call.1} parent=35 // pred_check_branch
          %232 = sbr.rel (%p230) target = $region44
        $region43: #{tpu_custom_call.1} parent=35 // pred_region
          %233 = dma.done [#allocation6], 512
        $region44: #{tpu_custom_call.1} parent=35 // pred_fallthru
          _
        %s234 = sand.u32 %s22, 1
        %s235 = scalar_lea.sflag [#allocation3], %s234
        %s236 = sand.u32 %s98, 1
        %s237 = smul.addr %s236, 16
        %s238 = scalar_lea.vmem [#allocation7], %s237
        // Predicated region
        $region45: #{tpu_custom_call.1} parent=35 // pred_check
          %p239 = pneg %p111
        $region46: #{tpu_custom_call.1} parent=35 // pred_check_branch
          %241 = sbr.rel (%p239) target = $region48
        $region47: #{tpu_custom_call.1} parent=35 // pred_region
          %242 = dma.done %s235, 256
        $region48: #{tpu_custom_call.1} parent=35 // pred_fallthru
          _
        %s243 = sand.u32 %s22, 1
        %s244 = scalar_lea.sflag [#allocation3], %s243
        %s245 = sand.u32 %s30, 1
        %s246 = smul.addr %s245, 16
        %s247 = scalar_lea.vmem [#allocation2], %s246
        %p248 = pneg %p43
        %p249 = pneg %p40
        %p250 = pneg %p64
        %p251 = pneg %p61
        %p252 = pneg %p85
        %p253 = pneg %p82
        %s254 = sand.u32 %s22, 1
        %s255 = scalar_lea.sflag [#allocation3], %s254
        %s256 = sand.u32 %s98, 1
        %s257 = smul.addr %s256, 16
        %s258 = scalar_lea.vmem [#allocation7], %s257
        %p259 = pneg %p111
        %p260 = pneg %p108
        %p261 = pneg %p137
        %p262 = pneg %p134
        %s263 = sand.u32 %s124, 1
        %s264 = scalar_lea.sflag [#allocation4], %s263
        %s265 = sand.u32 %s124, 1
        %s266 = smul.addr %s265, 8
        %s267 = scalar_lea.vmem [#allocation8], %s266
        %v269 = vld [vmem:[%s225] sm:$0xff]
        %v270 = vld [vmem:[%s225 + $0x8] sm:$0xff]
        %v271 = vpack.c.bf16 %v270, %v269
        %v272 = vld [vmem:[#allocation5] sm:$0xff]
        %v273 = vld [vmem:[#allocation5 + $0x8] sm:$0xff]
        %v274 = vld [vmem:[#allocation5 + $0x10] sm:$0xff]
        %v275 = vld [vmem:[#allocation5 + $0x18] sm:$0xff]
        %v276 = vld [vmem:[%s2] sm:$0x3]
        %v278 = vlaneseq
        %v279 = vshrl.u32 %v278, 7
        %v280 = vsub.s32 0, %v279
        %v281 = vrot.slane %v276, %v280
        %v282 = vlaneseq
        %v283 = vshrl.u32 %v282, 7
        %v284 = vsub.s32 1, %v283
        %v285 = vrot.slane %v276, %v284
        %v292 = vunpack.c.l.b16 %v272
        %v293 = vunpack.c.h.b16 %v272
        %v294 = vunpack.c.l.b16 %v273
        %v295 = vunpack.c.h.b16 %v273
        %v296 = vunpack.c.l.b16 %v274
        %v297 = vunpack.c.h.b16 %v274
        %v298 = vunpack.c.l.b16 %v275
        %v299 = vunpack.c.h.b16 %v275
        %v300 = vpack.c.b16 %v294, %v292
        %v301 = vpack.c.b16 %v295, %v293
        %v302 = vpack.c.b16 %v298, %v296
        %v303 = vpack.c.b16 %v299, %v297
        %vm308 = vcmask 261120
        %v310 = vsel %vm308, %v271, 0
        %312 = vmatprep.subr.bf16.mxu0 %v301
        %313 = vmatpush1.bf16.msra.mxu0 %v300
        %314 = vmatprep.subr.bf16.mxu0 %v303
        %315 = vmatpush1.bf16.msra.mxu0 %v302
        %316 = vmatprep.subr.bf16.mxu0 0
        %317 = vmatpush1.bf16.msra.mxu0 0
        %318 = vmatprep.subr.bf16.mxu0 0
        %319 = vmatpush1.bf16.msra.mxu0 0
        %320 = vmatprep.subr.bf16.mxu0 0
        %321 = vmatpush1.bf16.msra.mxu0 0
        %322 = vmatprep.subr.bf16.mxu0 0
        %323 = vmatpush1.bf16.msra.mxu0 0
        %324 = vmatprep.subr.bf16.mxu0 0
        %325 = vmatpush1.bf16.msra.mxu0 0
        %326 = vmatprep.subr.bf16.mxu0 0
        %327 = vmatpush1.bf16.msra.mxu0 0
        %328 = vmatprep.subr.bf16.mxu0 0
        %329 = vmatpush1.bf16.msra.mxu0 0
        %330 = vmatprep.subr.bf16.mxu0 0
        %331 = vmatpush1.bf16.msra.mxu0 0
        %332 = vmatprep.subr.bf16.mxu0 0
        %333 = vmatpush1.bf16.msra.mxu0 0
        %334 = vmatprep.subr.bf16.mxu0 0
        %335 = vmatpush1.bf16.msra.mxu0 0
        %336 = vmatprep.subr.bf16.mxu0 0
        %337 = vmatpush1.bf16.msra.mxu0 0
        %338 = vmatprep.subr.bf16.mxu0 0
        %339 = vmatpush1.bf16.msra.mxu0 0
        %340 = vmatprep.subr.bf16.mxu0 0
        %341 = vmatpush1.bf16.msra.mxu0 0
        %342 = vmatprep.subr.bf16.mxu0 0
        %343 = vmatpush1.bf16.msra.mxu0 0
        %344 = vmatprep.mubr.bf16.mxu0 0
        %345 = vmatmul.mubr.bf16.gmra.mrb[0].mxu0 %v310
        %v346 = vpop.f32.mrb[0].mxu0
        %v347 = vadd.f32 %v281, %v346
        %v348 = vpop.f32.mrb[0].mxu0
        %v349 = vadd.f32 %v285, %v348
        %v350 = vpop.f32.mrb[0].mxu0
        %v351 = vadd.f32 %v281, %v350
        %v352 = vpop.f32.mrb[0].mxu0
        %v353 = vadd.f32 %v285, %v352
        %354 = vdwg.mxu0
        %v355 = vpack.c.bf16 %v347, %v347
        %357 = vrot.lane.b32.xlu0 %v355, 64
        %v358 = vpop.permute.xlu0 %357
        %vm359 = vcmask 523264
        %v361 = vsel %vm359, %v355, 0
        %v364 = vsel %vm359, %v358, 0
        %366 = vmatprep.subr.bf16.mxu0 0
        %367 = vmatpush1.bf16.xpose.msra.mxu0 %v364
        %368 = vmatprep.subr.bf16.mxu0 0
        %369 = vmatpush1.bf16.xpose.msra.mxu0 0
        %370 = vmatprep.subr.bf16.mxu0 0
        %371 = vmatpush1.bf16.xpose.msra.mxu0 0
        %372 = vmatprep.subr.bf16.mxu0 0
        %373 = vmatpush1.bf16.xpose.msra.mxu0 0
        %374 = vmatprep.subr.bf16.mxu0 0
        %375 = vmatpush1.bf16.xpose.msra.mxu0 0
        %376 = vmatprep.subr.bf16.mxu0 0
        %377 = vmatpush1.bf16.xpose.msra.mxu0 0
        %378 = vmatprep.subr.bf16.mxu0 0
        %379 = vmatpush1.bf16.xpose.msra.mxu0 0
        %380 = vmatprep.subr.bf16.mxu0 0
        %381 = vmatpush1.bf16.xpose.msra.mxu0 0
        %382 = vmatprep.subr.bf16.mxu0 0
        %383 = vmatpush1.bf16.xpose.msra.mxu0 0
        %384 = vmatprep.subr.bf16.mxu0 0
        %385 = vmatpush1.bf16.xpose.msra.mxu0 0
        %386 = vmatprep.subr.bf16.mxu0 0
        %387 = vmatpush1.bf16.xpose.msra.mxu0 0
        %388 = vmatprep.subr.bf16.mxu0 0
        %389 = vmatpush1.bf16.xpose.msra.mxu0 0
        %390 = vmatprep.subr.bf16.mxu0 0
        %391 = vmatpush1.bf16.xpose.msra.mxu0 0
        %392 = vmatprep.subr.bf16.mxu0 0
        %393 = vmatpush1.bf16.xpose.msra.mxu0 0
        %394 = vmatprep.subr.bf16.mxu0 0
        %395 = vmatpush1.bf16.xpose.msra.mxu0 0
        %396 = vmatprep.subr.bf16.mxu0 0
        %397 = vmatpush1.bf16.xpose.msra.mxu0 0
        %398 = vmatprep.mubr.bf16.mxu0 0
        %399 = vmatmul.mubr.bf16.gmra.mrb[0].mxu0 %v361
        %v400 = vpop.f32.mrb[0].mxu0
        %v401 = vadd.f32 0.0, %v400
        %v402 = vpop.f32.mrb[0].mxu0
        %v403 = vpop.f32.mrb[0].mxu0
        %v404 = vpop.f32.mrb[0].mxu0
        %405 = vdwg.mxu0
        %v406 = vmul.f32 %v401, 0.125
        %vm407 = vcmask 64512
        %v408 = vsel %vm407, %v406, -inf
        %409 = vmax.xlane.f32.xlu0 %v408
        %v410 = vpop.xlane.xlu0 %409
        %v411 = vsub.f32 %v406, %v410
        %v412 = vmul.f32 %v411, 1.442695
        %v413 = vpow.pop %v412
        %v414 = vsel %vm407, %v413, 0.0
        %415 = vadd.xlane.f32.xlu0 %v414
        %v416 = vpop.xlane.xlu0 %415
        %v417 = vrcp.pop %v416
        %v418 = vmul.f32 %v413, %v417
        %v419 = vld [vmem:[%s238] sm:$0xff]
        %v420 = vmul.f32 %v418, %v419
        %v421 = vpack.c.bf16 %v420, %v420
        %v422 = vpack.c.bf16 %v349, %v349
        %v424 = vsel %vm407, %v421, 0
        %vm426 = vcmask 1043456
        %v428 = vsel %vm426, %v422, 0
        %430 = vmatprep.subr.bf16.mxu0 0
        %431 = vmatpush1.bf16.msra.mxu0 %v428
        %432 = vmatprep.subr.bf16.mxu0 0
        %433 = vmatpush1.bf16.msra.mxu0 0
        %434 = vmatprep.subr.bf16.mxu0 0
        %435 = vmatpush1.bf16.msra.mxu0 0
        %436 = vmatprep.subr.bf16.mxu0 0
        %437 = vmatpush1.bf16.msra.mxu0 0
        %438 = vmatprep.subr.bf16.mxu0 0
        %439 = vmatpush1.bf16.msra.mxu0 0
        %440 = vmatprep.subr.bf16.mxu0 0
        %441 = vmatpush1.bf16.msra.mxu0 0
        %442 = vmatprep.subr.bf16.mxu0 0
        %443 = vmatpush1.bf16.msra.mxu0 0
        %444 = vmatprep.subr.bf16.mxu0 0
        %445 = vmatpush1.bf16.msra.mxu0 0
        %446 = vmatprep.subr.bf16.mxu0 0
        %447 = vmatpush1.bf16.msra.mxu0 0
        %448 = vmatprep.subr.bf16.mxu0 0
        %449 = vmatpush1.bf16.msra.mxu0 0
        %450 = vmatprep.subr.bf16.mxu0 0
        %451 = vmatpush1.bf16.msra.mxu0 0
        %452 = vmatprep.subr.bf16.mxu0 0
        %453 = vmatpush1.bf16.msra.mxu0 0
        %454 = vmatprep.subr.bf16.mxu0 0
        %455 = vmatpush1.bf16.msra.mxu0 0
        %456 = vmatprep.subr.bf16.mxu0 0
        %457 = vmatpush1.bf16.msra.mxu0 0
        %458 = vmatprep.subr.bf16.mxu0 0
        %459 = vmatpush1.bf16.msra.mxu0 0
        %460 = vmatprep.subr.bf16.mxu0 0
        %461 = vmatpush1.bf16.msra.mxu0 0
        %462 = vmatprep.mubr.bf16.mxu0 0
        %463 = vmatmul.mubr.bf16.gmra.mrb[0].mxu0 %v424
        %v464 = vpop.f32.mrb[0].mxu0
        %v465 = vadd.f32 0.0, %v464
        %v466 = vpop.f32.mrb[0].mxu0
        %v467 = vpop.f32.mrb[0].mxu0
        %v468 = vpop.f32.mrb[0].mxu0
        %469 = vdwg.mxu0
        %v470 = vpack.c.bf16 %v351, %v351
        %472 = vrot.lane.b32.xlu0 %v470, 64
        %v473 = vpop.permute.xlu0 %472
        %v475 = vsel %vm359, %v470, 0
        %v478 = vsel %vm359, %v473, 0
        %480 = vmatprep.subr.bf16.mxu0 0
        %481 = vmatpush1.bf16.xpose.msra.mxu0 %v478
        %482 = vmatprep.subr.bf16.mxu0 0
        %483 = vmatpush1.bf16.xpose.msra.mxu0 0
        %484 = vmatprep.subr.bf16.mxu0 0
        %485 = vmatpush1.bf16.xpose.msra.mxu0 0
        %486 = vmatprep.subr.bf16.mxu0 0
        %487 = vmatpush1.bf16.xpose.msra.mxu0 0
        %488 = vmatprep.subr.bf16.mxu0 0
        %489 = vmatpush1.bf16.xpose.msra.mxu0 0
        %490 = vmatprep.subr.bf16.mxu0 0
        %491 = vmatpush1.bf16.xpose.msra.mxu0 0
        %492 = vmatprep.subr.bf16.mxu0 0
        %493 = vmatpush1.bf16.xpose.msra.mxu0 0
        %494 = vmatprep.subr.bf16.mxu0 0
        %495 = vmatpush1.bf16.xpose.msra.mxu0 0
        %496 = vmatprep.subr.bf16.mxu0 0
        %497 = vmatpush1.bf16.xpose.msra.mxu0 0
        %498 = vmatprep.subr.bf16.mxu0 0
        %499 = vmatpush1.bf16.xpose.msra.mxu0 0
        %500 = vmatprep.subr.bf16.mxu0 0
        %501 = vmatpush1.bf16.xpose.msra.mxu0 0
        %502 = vmatprep.subr.bf16.mxu0 0
        %503 = vmatpush1.bf16.xpose.msra.mxu0 0
        %504 = vmatprep.subr.bf16.mxu0 0
        %505 = vmatpush1.bf16.xpose.msra.mxu0 0
        %506 = vmatprep.subr.bf16.mxu0 0
        %507 = vmatpush1.bf16.xpose.msra.mxu0 0
        %508 = vmatprep.subr.bf16.mxu0 0
        %509 = vmatpush1.bf16.xpose.msra.mxu0 0
        %510 = vmatprep.subr.bf16.mxu0 0
        %511 = vmatpush1.bf16.xpose.msra.mxu0 0
        %512 = vmatprep.mubr.bf16.mxu0 0
        %513 = vmatmul.mubr.bf16.gmra.mrb[0].mxu0 %v475
        %v514 = vpop.f32.mrb[0].mxu0
        %v515 = vadd.f32 0.0, %v514
        %v516 = vpop.f32.mrb[0].mxu0
        %v517 = vpop.f32.mrb[0].mxu0
        %v518 = vpop.f32.mrb[0].mxu0
        %519 = vdwg.mxu0
        %v520 = vmul.f32 %v515, 0.125
        %v521 = vsel %vm407, %v520, -inf
        %522 = vmax.xlane.f32.xlu0 %v521
        %v523 = vpop.xlane.xlu0 %522
        %v524 = vsub.f32 %v520, %v523
        %v525 = vmul.f32 %v524, 1.442695
        %v526 = vpow.pop %v525
        %v527 = vsel %vm407, %v526, 0.0
        %528 = vadd.xlane.f32.xlu0 %v527
        %v529 = vpop.xlane.xlu0 %528
        %v530 = vrcp.pop %v529
        %v531 = vmul.f32 %v526, %v530
        %s532 = scalar_lea.vmem %s238, 8 [#allocation7]
        %v533 = vld [vmem:[%s532] sm:$0xff]
        %v534 = vmul.f32 %v531, %v533
        %v535 = vpack.c.bf16 %v534, %v534
        %v536 = vpack.c.bf16 %v353, %v353
        %v538 = vsel %vm407, %v535, 0
        %v541 = vsel %vm426, %v536, 0
        %543 = vmatprep.subr.bf16.mxu0 0
        %544 = vmatpush1.bf16.msra.mxu0 %v541
        %545 = vmatprep.subr.bf16.mxu0 0
        %546 = vmatpush1.bf16.msra.mxu0 0
        %547 = vmatprep.subr.bf16.mxu0 0
        %548 = vmatpush1.bf16.msra.mxu0 0
        %549 = vmatprep.subr.bf16.mxu0 0
        %550 = vmatpush1.bf16.msra.mxu0 0
        %551 = vmatprep.subr.bf16.mxu0 0
        %552 = vmatpush1.bf16.msra.mxu0 0
        %553 = vmatprep.subr.bf16.mxu0 0
        %554 = vmatpush1.bf16.msra.mxu0 0
        %555 = vmatprep.subr.bf16.mxu0 0
        %556 = vmatpush1.bf16.msra.mxu0 0
        %557 = vmatprep.subr.bf16.mxu0 0
        %558 = vmatpush1.bf16.msra.mxu0 0
        %559 = vmatprep.subr.bf16.mxu0 0
        %560 = vmatpush1.bf16.msra.mxu0 0
        %561 = vmatprep.subr.bf16.mxu0 0
        %562 = vmatpush1.bf16.msra.mxu0 0
        %563 = vmatprep.subr.bf16.mxu0 0
        %564 = vmatpush1.bf16.msra.mxu0 0
        %565 = vmatprep.subr.bf16.mxu0 0
        %566 = vmatpush1.bf16.msra.mxu0 0
        %567 = vmatprep.subr.bf16.mxu0 0
        %568 = vmatpush1.bf16.msra.mxu0 0
        %569 = vmatprep.subr.bf16.mxu0 0
        %570 = vmatpush1.bf16.msra.mxu0 0
        %571 = vmatprep.subr.bf16.mxu0 0
        %572 = vmatpush1.bf16.msra.mxu0 0
        %573 = vmatprep.subr.bf16.mxu0 0
        %574 = vmatpush1.bf16.msra.mxu0 0
        %575 = vmatprep.mubr.bf16.mxu0 0
        %576 = vmatmul.mubr.bf16.gmra.mrb[0].mxu0 %v538
        %v577 = vpop.f32.mrb[0].mxu0
        %v578 = vadd.f32 0.0, %v577
        %v579 = vpop.f32.mrb[0].mxu0
        %v580 = vpop.f32.mrb[0].mxu0
        %v581 = vpop.f32.mrb[0].mxu0
        %582 = vdwg.mxu0
        %584 = vrot.lane.b32.xlu0 %v578, 64
        %v585 = vpop.permute.xlu0 %584
        %v587 = vsel %vm359, %v465, %v585
        %588 = vst [vmem:[%s267] sm:$0xff] %v587
        %s589 = sand.u32 %s124, 1
        %s590 = scalar_lea.sflag [#allocation4], %s589
        %s591 = sand.u32 %s124, 1
        %s592 = smul.addr %s591, 8
        %s593 = scalar_lea.vmem [#allocation8], %s592
        // Predicated region
        $region49: #{tpu_custom_call.1} parent=35 // pred_check
          %p594 = pneg %p134
        $region50: #{tpu_custom_call.1} parent=35 // pred_check_branch
          %596 = sbr.rel (%p594) target = $region52
        $region51: #{tpu_custom_call.1} parent=35 // pred_region
          %s598 = ssub.s32 128, 128
          %599 = vsyncadd %s590, %s598
          %s600 = smul.addr %s22, 128
          %s601 = scalar_lea.hbm %s4, %s600
          %s603 = sshll.u32 %s593, 4
          %s604 = int_to_ptr.vmem [resolvable:$true] %s603
          %606 = dma.vmem_to_hbm [thread:$0]  %s604, 128, %s601, %s590
        $region52: #{tpu_custom_call.1} parent=35 // pred_fallthru
          _
      $region36: #{tpu_custom_call.1} parent=5 // pred_fallthru
        _
      %p607 = scmp.le.s32.totalorder 2, %s17
      // Predicated region
      $region53: #{tpu_custom_call.1} parent=5 // pred_check
        %p608 = pneg %p607
      $region54: #{tpu_custom_call.1} parent=5 // pred_check_branch
        %610 = sbr.rel (%p608) target = $region56
      $region55: #{tpu_custom_call.1} parent=5 // pred_region
        %s611 = ssub.s32 %s17, 2
        // Predicated region
        $region57: #{tpu_custom_call.1} parent=55 // pred_check
          %p612 = pneg %p140
        $region58: #{tpu_custom_call.1} parent=55 // pred_check_branch
          %614 = sbr.rel (%p612) target = $region60
        $region59: #{tpu_custom_call.1} parent=55 // pred_region
          %s615 = sand.u32 %s125, 1
          %s616 = scalar_lea.sflag [#allocation4], %s615
          %s617 = sand.u32 %s125, 1
          %s618 = smul.addr %s617, 8
          %s619 = scalar_lea.vmem [#allocation8], %s618
          %620 = dma.done %s616, 128
        $region60: #{tpu_custom_call.1} parent=55 // pred_fallthru
          _
      $region56: #{tpu_custom_call.1} parent=5 // pred_fallthru
        _
    $region6: #{tpu_custom_call.1} parent=1 // loop_footer
      %s21 = sadd.s32 1, %s17
    $region7: #{tpu_custom_call.1} parent=1 // loop_footer_branch
      %16 = sbr.rel target = $region3
    $region8: #{tpu_custom_call.1} parent=1 // loop_exit
      _
    %621 = vsyncpa [#allocation3], 1
    %s622 = scalar_lea.sflag [#allocation3], 1
    %623 = vsyncpa %s622, 1
    %624 = vsyncpa [#allocation6], 1
    %625 = vsyncpa [#allocation4], 1
    %s626 = scalar_lea.sflag [#allocation4], 1
    %627 = vsyncpa %s626, 1

</llo_original>
